<compile_context>
chip_gen: v7x
topology: tpu7x:2x2x1
jax: 0.10.0
libtpu: 0.0.40
codegen_flags: <defaults>
</compile_context>

<pallas_src>
from functools import partial

import jax
import jax.numpy as jnp
from jax.experimental import pallas as pl
from jax.experimental.pallas import tpu as pltpu


_BIAS_ROWS = 8  # bias block (3 rows used) padded to 8 sublanes


def _round_up(x, m):
    return (x + m - 1) // m * m


# ----------------------------------------------------------------------------
# Kernel factory: static slab offsets baked into the closure.
# ----------------------------------------------------------------------------
def _make_critic_kernel(Wp, Kc, n_heads):
    """Slab layout (f32, [2*Wp + Kc + 8, Wp]):
         rows [0, Wp)            : W2a  (block-diagonal over critics)
         rows [Wp, Wp+Kc)        : W2b  (state+action rows, zero padded to Kc)
         rows [Wp+Kc, 2*Wp+Kc)   : W3   (critic i's head lives in column i)
         row  2*Wp+Kc            : b1
         row  2*Wp+Kc + 1        : b2
         row  2*Wp+Kc + 2        : b3   (critic i's bias in column i)
    """
    r_w2a = 0
    r_w2b = Wp
    r_w3 = Wp + Kc
    r_b = 2 * Wp + Kc

    def kernel(obs_ref, comb_ref, w1_ref, slab_ref, *q_refs):
        # Layer 1 (obs encoder), all critics at once: bf16 MXU, f32 accumulate.
        x16 = obs_ref[...].astype(jnp.bfloat16)
        h1 = jnp.dot(x16, w1_ref[...], preferred_element_type=jnp.float32)
        h1 = jnp.maximum(h1 + slab_ref[r_b:r_b + 1, :], 0.0)               # [B, Wp]

        # Layer 2: fused concat via split weights (block-diag W2a + stacked W2b).
        h2 = (jnp.dot(h1, slab_ref[r_w2a:r_w2a + Wp, :],
                      preferred_element_type=jnp.float32)
              + jnp.dot(comb_ref[...], slab_ref[r_w2b:r_w2b + Kc, :],
                        preferred_element_type=jnp.float32)
              + slab_ref[r_b + 1:r_b + 2, :])
        h2 = jnp.maximum(h2, 0.0)                                          # [B, Wp]

        # Layer 3: block-structured Q heads -- one full-width MXU pass; only
        # columns 0:n_heads of W3/b3 are non-zero.
        q = (jnp.dot(h2, slab_ref[r_w3:r_w3 + Wp, :],
                     preferred_element_type=jnp.float32)
             + slab_ref[r_b + 2:r_b + 3, :])                               # [B, Wp]
        for i, q_ref in enumerate(q_refs):
            q_ref[...] = q[:, i:i + 1]

    return kernel


# ----------------------------------------------------------------------------
# Parameter construction (per-critic, mirroring the PyTorch critic) + packing.
# ----------------------------------------------------------------------------
def init_critic_params(key, obs_feat, comb_dim, hidden=32):
    k1, k2, k3, k4, k5, k6 = jax.random.split(key, 6)
    return {
        "w1": jax.random.normal(k1, (obs_feat, hidden), jnp.float32) / jnp.sqrt(obs_feat),
        "b1": jax.random.normal(k4, (hidden,), jnp.float32) * 0.05,
        "w2": jax.random.normal(k2, (hidden + comb_dim, hidden), jnp.float32)
              / jnp.sqrt(hidden + comb_dim),
        "b2": jax.random.normal(k5, (hidden,), jnp.float32) * 0.05,
        "w3": jax.random.normal(k3, (hidden, 1), jnp.float32) / jnp.sqrt(hidden),
        "b3": jax.random.normal(k6, (1,), jnp.float32) * 0.05,
    }


def _pack_critics(params_list, comb_dim):
    """Pack N critics into (bf16 W1 slab, one contiguous f32 weight slab)."""
    H = params_list[0]["w1"].shape[1]
    Kc = _round_up(comb_dim, 8)
    n = len(params_list)
    Wp = n * H
    r_w2b = Wp
    r_w3 = Wp + Kc
    r_b = 2 * Wp + Kc
    R = r_b + _BIAS_ROWS

    # Layer-1 weights side by side, stored bf16 (halves the only large DMA).
    w1 = jnp.concatenate([p["w1"] for p in params_list], axis=1).astype(jnp.bfloat16)

    slab = jnp.zeros((R, Wp), jnp.float32)
    for i, p in enumerate(params_list):
        c0 = i * H
        slab = slab.at[c0:c0 + H, c0:c0 + H].set(p["w2"][:H, :])            # W2a block
        slab = slab.at[r_w2b:r_w2b + comb_dim, c0:c0 + H].set(p["w2"][H:, :])  # W2b
        slab = slab.at[r_w3 + c0:r_w3 + c0 + H, i].set(p["w3"][:, 0])       # W3 head i
        slab = slab.at[r_b, c0:c0 + H].set(p["b1"])
        slab = slab.at[r_b + 1, c0:c0 + H].set(p["b2"])
        slab = slab.at[r_b + 2, i].set(p["b3"][0])
    return {"w1": w1, "slab": slab}


def pack_twin_critics(p1, p2, comb_dim):
    """Both layouts built offline: full twin layout + a critic-1-only layout."""
    return {"both": _pack_critics([p1, p2], comb_dim),
            "q1": _pack_critics([p1], comb_dim)}


# ----------------------------------------------------------------------------
# Forward pass (mirrors QFunction.forward).
# ----------------------------------------------------------------------------
def _critic_call(obs_flat, combined, w1, slab, n_heads):
    B, F = obs_flat.shape
    Wp = slab.shape[1]
    Kc = slab.shape[0] - 2 * Wp - _BIAS_ROWS
    kernel = _make_critic_kernel(Wp, Kc, n_heads)

    flops = 2 * B * (F * Wp + Wp * Wp + Kc * Wp + Wp * Wp)
    bytes_accessed = (obs_flat.size * 4 + combined.size * 4
                      + w1.size * 2 + slab.size * 4 + n_heads * B * 4)

    vmem = pl.BlockSpec(memory_space=pltpu.MemorySpace.VMEM)
    out_shape = tuple(jax.ShapeDtypeStruct((B, 1), jnp.float32) for _ in range(n_heads))
    return pl.pallas_call(
        kernel,
        out_shape=out_shape,
        in_specs=[vmem] * 4,
        out_specs=tuple(vmem for _ in range(n_heads)),
        cost_estimate=pl.CostEstimate(flops=flops, transcendentals=0,
                                      bytes_accessed=bytes_accessed),
    )(obs_flat, combined, w1, slab)


@partial(jax.jit, static_argnames=("q1_only",))
def qfunction_forward(observations, robot_state, action, packed, q1_only=False):
    """Returns (q1, q2); q2 is None when q1_only=True (as in the PyTorch module)."""
    B = observations.shape[0]
    obs_flat = observations.reshape(B, -1).astype(jnp.float32)      # obs.view(B, -1)

    sub = packed["q1"] if q1_only else packed["both"]
    Wp = sub["slab"].shape[1]
    Kc = sub["slab"].shape[0] - 2 * Wp - _BIAS_ROWS

    # combined = cat([robot_state, action.float()], dim=1), zero-padded to Kc
    # (single fused XLA concat; the padded rows of W2b are zero).
    comb_dim = robot_state.shape[1] + action.shape[1]
    parts = [robot_state.astype(jnp.float32), action.astype(jnp.float32)]
    if Kc > comb_dim:
        parts.append(jnp.zeros((B, Kc - comb_dim), jnp.float32))
    combined = jnp.concatenate(parts, axis=1)

    if q1_only:
        (q1,) = _critic_call(obs_flat, combined, sub["w1"], sub["slab"], n_heads=1)
        return q1, None
    q1, q2 = _critic_call(obs_flat, combined, sub["w1"], sub["slab"], n_heads=2)
    return q1, q2


# ----------------------------------------------------------------------------
# Self-test
# ----------------------------------------------------------------------------
if __name__ == "__main__":
    key = jax.random.PRNGKey(0)
    k_obs, k_state, k_act, k_p1, k_p2 = jax.random.split(key, 5)

    # Small shapes consistent with the module: image observations (NCHW),
    # low-dim robot state, continuous action.
    B, C, H, W = 2, 4, 16, 16
    STATE_DIM, ACT_DIM = 8, 4
    HIDDEN = 32

    observations = jax.random.normal(k_obs, (B, C, H, W), jnp.float32)
    robot_state = jax.random.normal(k_state, (B, STATE_DIM), jnp.float32)
    action = jax.random.normal(k_act, (B, ACT_DIM), jnp.float32)

    obs_feat = C * H * W
    comb_dim = STATE_DIM + ACT_DIM
    params_q1 = init_critic_params(k_p1, obs_feat, comb_dim, HIDDEN)
    params_q2 = init_critic_params(k_p2, obs_feat, comb_dim, HIDDEN)
    packed = pack_twin_critics(params_q1, params_q2, comb_dim)

    q1, q2 = qfunction_forward(observations, robot_state, action, packed, q1_only=False)
    jax.block_until_ready((q1, q2))

    # Pure-JAX reference in the original (un-packed, concat-based) form.
    # NOTE: layer 1 replicates the kernel's deliberate bf16 W1 storage / bf16
    # activation cast (~1e-3 relative numerics change vs the f32 PyTorch model;
    # acceptable for TD3's min(q1, q2) target).
    def ref_critic(obs_flat, state, act, p):
        x16 = obs_flat.astype(jnp.bfloat16)
        w1_16 = p["w1"].astype(jnp.bfloat16)
        h1 = jnp.dot(x16, w1_16, preferred_element_type=jnp.float32) + p["b1"][None, :]
        h1 = jnp.maximum(h1, 0.0)
        combined = jnp.concatenate([state, act], axis=1)
        h2 = jnp.maximum(
            jnp.concatenate([h1, combined], axis=1) @ p["w2"] + p["b2"][None, :], 0.0)
        return h2 @ p["w3"] + p["b3"][None, :]

    obs_flat = observations.reshape(B, -1)
    r1 = ref_critic(obs_flat, robot_state, action, params_q1)
    r2 = ref_critic(obs_flat, robot_state, action, params_q2)

    assert q1.shape == (B, 1) and q2.shape == (B, 1)
    assert jnp.allclose(q1, r1, atol=2e-3, rtol=2e-3)
    assert jnp.allclose(q2, r2, atol=2e-3, rtol=2e-3)

    # q1_only path: specialized (critic-1-only weights, single output), q2 None.
    q1_only, q2_only = qfunction_forward(observations, robot_state, action, packed,
                                         q1_only=True)
    jax.block_until_ready(q1_only)
    assert q2_only is None
    assert q1_only.shape == (B, 1)
    assert jnp.allclose(q1_only, r1, atol=2e-3, rtol=2e-3)
    assert jnp.allclose(q1_only, q1, atol=1e-4, rtol=1e-4)

    print("KERNEL_OK")
</pallas_src>

<mosaic_0001>
module attributes {stable_mosaic.version = 11 : i64} {
  func.func @kernel(%arg0: memref<2x1024xf32, #tpu.memory_space<vmem>>, %arg1: memref<2x16xf32, #tpu.memory_space<vmem>>, %arg2: memref<1024x64xbf16, #tpu.memory_space<vmem>>, %arg3: memref<152x64xf32, #tpu.memory_space<vmem>>, %arg4: memref<2x1xf32, #tpu.memory_space<vmem>>, %arg5: memref<2x1xf32, #tpu.memory_space<vmem>>) attributes {dimension_semantics = [], scalar_prefetch = 0 : i64, scratch_operands = 0 : i64, tpu.core_type = #tpu.core_type<tc>} {
    %c0 = arith.constant 0 : index
    %c0_0 = arith.constant 0 : index
    %0 = vector.load %arg0[%c0, %c0_0] : memref<2x1024xf32, #tpu.memory_space<vmem>>, vector<2x1024xf32>
    %1 = arith.truncf %0 : vector<2x1024xf32> to vector<2x1024xbf16>
    %c0_1 = arith.constant 0 : index
    %c0_2 = arith.constant 0 : index
    %2 = vector.load %arg2[%c0_1, %c0_2] : memref<1024x64xbf16, #tpu.memory_space<vmem>>, vector<1024x64xbf16>
    %cst = arith.constant dense<0.000000e+00> : vector<2x64xf32>
    %3 = tpu.matmul %1, %2, %cst {dimension_numbers = #tpu.dot_dimension_numbers<[1], [0], [0], [1], [0, 0, 1, 1], [], []>} : vector<2x1024xbf16>, vector<1024x64xbf16>, vector<2x64xf32> -> vector<2x64xf32>
    %c144 = arith.constant 144 : index
    %c0_3 = arith.constant 0 : index
    %4 = vector.load %arg3[%c144, %c0_3] : memref<152x64xf32, #tpu.memory_space<vmem>>, vector<1x64xf32>
    %5 = vector.broadcast %4 : vector<1x64xf32> to vector<2x64xf32>
    %6 = arith.addf %3, %5 : vector<2x64xf32>
    %cst_4 = arith.constant 0.000000e+00 : f32
    %7 = vector.broadcast %cst_4 : f32 to vector<2x64xf32>
    %8 = arith.maximumf %6, %7 : vector<2x64xf32>
    %c0_5 = arith.constant 0 : index
    %c0_6 = arith.constant 0 : index
    %9 = vector.load %arg3[%c0_5, %c0_6] : memref<152x64xf32, #tpu.memory_space<vmem>>, vector<64x64xf32>
    %cst_7 = arith.constant dense<0.000000e+00> : vector<2x64xf32>
    %10 = tpu.matmul %8, %9, %cst_7 {dimension_numbers = #tpu.dot_dimension_numbers<[1], [0], [0], [1], [0, 0, 1, 1], [], []>} : vector<2x64xf32>, vector<64x64xf32>, vector<2x64xf32> -> vector<2x64xf32>
    %c0_8 = arith.constant 0 : index
    %c0_9 = arith.constant 0 : index
    %11 = vector.load %arg1[%c0_8, %c0_9] : memref<2x16xf32, #tpu.memory_space<vmem>>, vector<2x16xf32>
    %c64 = arith.constant 64 : index
    %c0_10 = arith.constant 0 : index
    %12 = vector.load %arg3[%c64, %c0_10] : memref<152x64xf32, #tpu.memory_space<vmem>>, vector<16x64xf32>
    %cst_11 = arith.constant dense<0.000000e+00> : vector<2x64xf32>
    %13 = tpu.matmul %11, %12, %cst_11 {dimension_numbers = #tpu.dot_dimension_numbers<[1], [0], [0], [1], [0, 0, 1, 1], [], []>} : vector<2x16xf32>, vector<16x64xf32>, vector<2x64xf32> -> vector<2x64xf32>
    %14 = arith.addf %10, %13 : vector<2x64xf32>
    %c145 = arith.constant 145 : index
    %c0_12 = arith.constant 0 : index
    %15 = vector.load %arg3[%c145, %c0_12] : memref<152x64xf32, #tpu.memory_space<vmem>>, vector<1x64xf32>
    %16 = vector.broadcast %15 : vector<1x64xf32> to vector<2x64xf32>
    %17 = arith.addf %14, %16 : vector<2x64xf32>
    %cst_13 = arith.constant 0.000000e+00 : f32
    %18 = vector.broadcast %cst_13 : f32 to vector<2x64xf32>
    %19 = arith.maximumf %17, %18 : vector<2x64xf32>
    %c80 = arith.constant 80 : index
    %c0_14 = arith.constant 0 : index
    %20 = vector.load %arg3[%c80, %c0_14] : memref<152x64xf32, #tpu.memory_space<vmem>>, vector<64x64xf32>
    %cst_15 = arith.constant dense<0.000000e+00> : vector<2x64xf32>
    %21 = tpu.matmul %19, %20, %cst_15 {dimension_numbers = #tpu.dot_dimension_numbers<[1], [0], [0], [1], [0, 0, 1, 1], [], []>} : vector<2x64xf32>, vector<64x64xf32>, vector<2x64xf32> -> vector<2x64xf32>
    %c146 = arith.constant 146 : index
    %c0_16 = arith.constant 0 : index
    %22 = vector.load %arg3[%c146, %c0_16] : memref<152x64xf32, #tpu.memory_space<vmem>>, vector<1x64xf32>
    %23 = vector.broadcast %22 : vector<1x64xf32> to vector<2x64xf32>
    %24 = arith.addf %21, %23 : vector<2x64xf32>
    %25 = vector.extract_strided_slice %24 {offsets = [0, 0], sizes = [2, 1], strides = [1, 1]} : vector<2x64xf32> to vector<2x1xf32>
    %c0_17 = arith.constant 0 : index
    %c0_18 = arith.constant 0 : index
    %26 = vector.load %arg4[%c0_17, %c0_18] : memref<2x1xf32, #tpu.memory_space<vmem>>, vector<2x1xf32>
    tpu.vector_store %arg4[%c0_17, %c0_18], %25 {strides = array<i32>} : memref<2x1xf32, #tpu.memory_space<vmem>>, vector<2x1xf32>,
    %27 = vector.extract_strided_slice %24 {offsets = [0, 1], sizes = [2, 1], strides = [1, 1]} : vector<2x64xf32> to vector<2x1xf32>
    %c0_19 = arith.constant 0 : index
    %c0_20 = arith.constant 0 : index
    %28 = vector.load %arg5[%c0_19, %c0_20] : memref<2x1xf32, #tpu.memory_space<vmem>>, vector<2x1xf32>
    tpu.vector_store %arg5[%c0_19, %c0_20], %27 {strides = array<i32>} : memref<2x1xf32, #tpu.memory_space<vmem>>, vector<2x1xf32>,
    return
  }
}

</mosaic_0001>

<llo_original>
// kernel: qfunction_forward.1
$region0: #{qfunction_forward.1}
  #allocation0 [shape = 'u32[]', space=smem, size = 0x4, offset = 0x4, fixed_abs, tag = 'smem constant byte address 0x4 - core index']
  #allocation1 [shape = 'u32[144,128]{1,0:T(1,128)}', space=vmem, size = 0x12000, scoped, tag = 'internal scratch']
  %s0 = inlined_call_operand.vmem [shape: f32[2,1024], index: 0, kind: input, shape index: {}]
  %s1 = inlined_call_operand.vmem [shape: f32[2,16], index: 1, kind: input, shape index: {}]
  %s2 = inlined_call_operand.vmem [shape: bf16[1024,64], index: 2, kind: input, shape index: {}]
  %s3 = inlined_call_operand.vmem [shape: f32[152,64], index: 3, kind: input, shape index: {}]
  %s4 = inlined_call_operand.vmem [shape: f32[2,1], index: 4, kind: output, shape index: {0}]
  %s5 = inlined_call_operand.vmem [shape: f32[2,1], index: 5, kind: output, shape index: {1}]
  %6 = xla_tuple %s4, %s5
  %s7 = sld [smem:[#allocation0]]
  $region34: #{qfunction_forward.1} parent=0
    _
  %s9 = ssub.s32 1, %s7
  %s10 = scalar_select 0, %s9, %s7
  // Predicated region
  $region2: #{qfunction_forward.1} parent=0 // pred_check
    _
  $region3: #{qfunction_forward.1} parent=0 // pred_check_branch
    %12 = sbr.rel (0) target = $region5
  $region4: #{qfunction_forward.1} parent=0 // pred_region
    _
  $region5: #{qfunction_forward.1} parent=0 // pred_fallthru
    _
  // Predicated region
  $region6: #{qfunction_forward.1} parent=0 // pred_check
    _
  $region7: #{qfunction_forward.1} parent=0 // pred_check_branch
    %14 = sbr.rel (0) target = $region9
  $region8: #{qfunction_forward.1} parent=0 // pred_region
    _
  $region9: #{qfunction_forward.1} parent=0 // pred_fallthru
    _
  // Predicated region
  $region10: #{qfunction_forward.1} parent=0 // pred_check
    _
  $region11: #{qfunction_forward.1} parent=0 // pred_check_branch
    %16 = sbr.rel (0) target = $region13
  $region12: #{qfunction_forward.1} parent=0 // pred_region
    _
  $region13: #{qfunction_forward.1} parent=0 // pred_fallthru
    _
  // Predicated region
  $region14: #{qfunction_forward.1} parent=0 // pred_check
    _
  $region15: #{qfunction_forward.1} parent=0 // pred_check_branch
    %18 = sbr.rel (0) target = $region17
  $region16: #{qfunction_forward.1} parent=0 // pred_region
    _
  $region17: #{qfunction_forward.1} parent=0 // pred_fallthru
    _
  %v20 = vld [vmem:[%s0] sm:$0xff]
  %v21 = vld [vmem:[%s0 + $0x8] sm:$0xff]
  %v24 = vcombine.high %v20, %v20
  %v26 = vunpack.c.l.s4 1983009808
  %v27 = vunpack.c.0.s8 %v26
  %v28 = vlaneseq
  %v29 = vshrl.u32 %v28, 7
  %v30 = vsub.s32 %v27, %v29
  %v31 = vrot.slane %v20, %v30
  %v33 = vunpack.c.l.s4 1983009808
  %v34 = vunpack.c.0.s8 %v33
  %v35 = vlaneseq
  %v36 = vshrl.u32 %v35, 7
  %v37 = vsub.s32 %v34, %v36
  %v38 = vrot.slane %v24, %v37
  %v39 = vcombine.high %v31, %v31
  %v40 = vcombine.high %v38, %v38
  %v41 = vcombine.high %v21, %v21
  %v43 = vunpack.c.l.s4 1983009808
  %v44 = vunpack.c.0.s8 %v43
  %v45 = vlaneseq
  %v46 = vshrl.u32 %v45, 7
  %v47 = vsub.s32 %v44, %v46
  %v48 = vrot.slane %v21, %v47
  %v50 = vunpack.c.l.s4 1983009808
  %v51 = vunpack.c.0.s8 %v50
  %v52 = vlaneseq
  %v53 = vshrl.u32 %v52, 7
  %v54 = vsub.s32 %v51, %v53
  %v55 = vrot.slane %v41, %v54
  %v56 = vcombine.high %v48, %v48
  %v57 = vcombine.high %v55, %v55
  %v66 = vpack.c.bf16 %v31, %v31
  %v67 = vpack.c.bf16 %v39, %v39
  %v68 = vpack.c.bf16 %v38, %v38
  %v69 = vpack.c.bf16 %v40, %v40
  %v70 = vpack.c.bf16 %v48, %v48
  %v71 = vpack.c.bf16 %v56, %v56
  %v72 = vpack.c.bf16 %v55, %v55
  %v73 = vpack.c.bf16 %v57, %v57
  %v74 = vld [vmem:[%s2] sm:$0xf]
  %v75 = vld [vmem:[%s2 + $0x4] sm:$0xf]
  %v76 = vld [vmem:[%s2 + $0x8] sm:$0xf]
  %v77 = vld [vmem:[%s2 + $0xc] sm:$0xf]
  %v78 = vld [vmem:[%s2 + $0x10] sm:$0xf]
  %v79 = vld [vmem:[%s2 + $0x14] sm:$0xf]
  %v80 = vld [vmem:[%s2 + $0x18] sm:$0xf]
  %v81 = vld [vmem:[%s2 + $0x1c] sm:$0xf]
  %v82 = vld [vmem:[%s2 + $0x20] sm:$0xf]
  %v83 = vld [vmem:[%s2 + $0x24] sm:$0xf]
  %v84 = vld [vmem:[%s2 + $0x28] sm:$0xf]
  %v85 = vld [vmem:[%s2 + $0x2c] sm:$0xf]
  %v86 = vld [vmem:[%s2 + $0x30] sm:$0xf]
  %v87 = vld [vmem:[%s2 + $0x34] sm:$0xf]
  %v88 = vld [vmem:[%s2 + $0x38] sm:$0xf]
  %v89 = vld [vmem:[%s2 + $0x3c] sm:$0xf]
  %v90 = vld [vmem:[%s2 + $0x40] sm:$0xf]
  %v91 = vld [vmem:[%s2 + $0x44] sm:$0xf]
  %v92 = vld [vmem:[%s2 + $0x48] sm:$0xf]
  %v93 = vld [vmem:[%s2 + $0x4c] sm:$0xf]
  %v94 = vld [vmem:[%s2 + $0x50] sm:$0xf]
  %v95 = vld [vmem:[%s2 + $0x54] sm:$0xf]
  %v96 = vld [vmem:[%s2 + $0x58] sm:$0xf]
  %v97 = vld [vmem:[%s2 + $0x5c] sm:$0xf]
  %v98 = vld [vmem:[%s2 + $0x60] sm:$0xf]
  %v99 = vld [vmem:[%s2 + $0x64] sm:$0xf]
  %v100 = vld [vmem:[%s2 + $0x68] sm:$0xf]
  %v101 = vld [vmem:[%s2 + $0x6c] sm:$0xf]
  %v102 = vld [vmem:[%s2 + $0x70] sm:$0xf]
  %v103 = vld [vmem:[%s2 + $0x74] sm:$0xf]
  %v104 = vld [vmem:[%s2 + $0x78] sm:$0xf]
  %v105 = vld [vmem:[%s2 + $0x7c] sm:$0xf]
  %v106 = vld [vmem:[%s2 + $0x80] sm:$0xf]
  %v107 = vld [vmem:[%s2 + $0x84] sm:$0xf]
  %v108 = vld [vmem:[%s2 + $0x88] sm:$0xf]
  %v109 = vld [vmem:[%s2 + $0x8c] sm:$0xf]
  %v110 = vld [vmem:[%s2 + $0x90] sm:$0xf]
  %v111 = vld [vmem:[%s2 + $0x94] sm:$0xf]
  %v112 = vld [vmem:[%s2 + $0x98] sm:$0xf]
  %v113 = vld [vmem:[%s2 + $0x9c] sm:$0xf]
  %v114 = vld [vmem:[%s2 + $0xa0] sm:$0xf]
  %v115 = vld [vmem:[%s2 + $0xa4] sm:$0xf]
  %v116 = vld [vmem:[%s2 + $0xa8] sm:$0xf]
  %v117 = vld [vmem:[%s2 + $0xac] sm:$0xf]
  %v118 = vld [vmem:[%s2 + $0xb0] sm:$0xf]
  %v119 = vld [vmem:[%s2 + $0xb4] sm:$0xf]
  %v120 = vld [vmem:[%s2 + $0xb8] sm:$0xf]
  %v121 = vld [vmem:[%s2 + $0xbc] sm:$0xf]
  %v122 = vld [vmem:[%s2 + $0xc0] sm:$0xf]
  %v123 = vld [vmem:[%s2 + $0xc4] sm:$0xf]
  %v124 = vld [vmem:[%s2 + $0xc8] sm:$0xf]
  %v125 = vld [vmem:[%s2 + $0xcc] sm:$0xf]
  %v126 = vld [vmem:[%s2 + $0xd0] sm:$0xf]
  %v127 = vld [vmem:[%s2 + $0xd4] sm:$0xf]
  %v128 = vld [vmem:[%s2 + $0xd8] sm:$0xf]
  %v129 = vld [vmem:[%s2 + $0xdc] sm:$0xf]
  %v130 = vld [vmem:[%s2 + $0xe0] sm:$0xf]
  %v131 = vld [vmem:[%s2 + $0xe4] sm:$0xf]
  %v132 = vld [vmem:[%s2 + $0xe8] sm:$0xf]
  %v133 = vld [vmem:[%s2 + $0xec] sm:$0xf]
  %v134 = vld [vmem:[%s2 + $0xf0] sm:$0xf]
  %v135 = vld [vmem:[%s2 + $0xf4] sm:$0xf]
  %v136 = vld [vmem:[%s2 + $0xf8] sm:$0xf]
  %v137 = vld [vmem:[%s2 + $0xfc] sm:$0xf]
  %v138 = vld [vmem:[%s2 + $0x100] sm:$0xf]
  %v139 = vld [vmem:[%s2 + $0x104] sm:$0xf]
  %v140 = vld [vmem:[%s2 + $0x108] sm:$0xf]
  %v141 = vld [vmem:[%s2 + $0x10c] sm:$0xf]
  %v142 = vld [vmem:[%s2 + $0x110] sm:$0xf]
  %v143 = vld [vmem:[%s2 + $0x114] sm:$0xf]
  %v144 = vld [vmem:[%s2 + $0x118] sm:$0xf]
  %v145 = vld [vmem:[%s2 + $0x11c] sm:$0xf]
  %v146 = vld [vmem:[%s2 + $0x120] sm:$0xf]
  %v147 = vld [vmem:[%s2 + $0x124] sm:$0xf]
  %v148 = vld [vmem:[%s2 + $0x128] sm:$0xf]
  %v149 = vld [vmem:[%s2 + $0x12c] sm:$0xf]
  %v150 = vld [vmem:[%s2 + $0x130] sm:$0xf]
  %v151 = vld [vmem:[%s2 + $0x134] sm:$0xf]
  %v152 = vld [vmem:[%s2 + $0x138] sm:$0xf]
  %v153 = vld [vmem:[%s2 + $0x13c] sm:$0xf]
  %v154 = vld [vmem:[%s2 + $0x140] sm:$0xf]
  %v155 = vld [vmem:[%s2 + $0x144] sm:$0xf]
  %v156 = vld [vmem:[%s2 + $0x148] sm:$0xf]
  %v157 = vld [vmem:[%s2 + $0x14c] sm:$0xf]
  %v158 = vld [vmem:[%s2 + $0x150] sm:$0xf]
  %v159 = vld [vmem:[%s2 + $0x154] sm:$0xf]
  %v160 = vld [vmem:[%s2 + $0x158] sm:$0xf]
  %v161 = vld [vmem:[%s2 + $0x15c] sm:$0xf]
  %v162 = vld [vmem:[%s2 + $0x160] sm:$0xf]
  %v163 = vld [vmem:[%s2 + $0x164] sm:$0xf]
  %v164 = vld [vmem:[%s2 + $0x168] sm:$0xf]
  %v165 = vld [vmem:[%s2 + $0x16c] sm:$0xf]
  %v166 = vld [vmem:[%s2 + $0x170] sm:$0xf]
  %v167 = vld [vmem:[%s2 + $0x174] sm:$0xf]
  %v168 = vld [vmem:[%s2 + $0x178] sm:$0xf]
  %v169 = vld [vmem:[%s2 + $0x17c] sm:$0xf]
  %v170 = vld [vmem:[%s2 + $0x180] sm:$0xf]
  %v171 = vld [vmem:[%s2 + $0x184] sm:$0xf]
  %v172 = vld [vmem:[%s2 + $0x188] sm:$0xf]
  %v173 = vld [vmem:[%s2 + $0x18c] sm:$0xf]
  %v174 = vld [vmem:[%s2 + $0x190] sm:$0xf]
  %v175 = vld [vmem:[%s2 + $0x194] sm:$0xf]
  %v176 = vld [vmem:[%s2 + $0x198] sm:$0xf]
  %v177 = vld [vmem:[%s2 + $0x19c] sm:$0xf]
  %v178 = vld [vmem:[%s2 + $0x1a0] sm:$0xf]
  %v179 = vld [vmem:[%s2 + $0x1a4] sm:$0xf]
  %v180 = vld [vmem:[%s2 + $0x1a8] sm:$0xf]
  %v181 = vld [vmem:[%s2 + $0x1ac] sm:$0xf]
  %v182 = vld [vmem:[%s2 + $0x1b0] sm:$0xf]
  %v183 = vld [vmem:[%s2 + $0x1b4] sm:$0xf]
  %v184 = vld [vmem:[%s2 + $0x1b8] sm:$0xf]
  %v185 = vld [vmem:[%s2 + $0x1bc] sm:$0xf]
  %v186 = vld [vmem:[%s2 + $0x1c0] sm:$0xf]
  %v187 = vld [vmem:[%s2 + $0x1c4] sm:$0xf]
  %v188 = vld [vmem:[%s2 + $0x1c8] sm:$0xf]
  %v189 = vld [vmem:[%s2 + $0x1cc] sm:$0xf]
  %v190 = vld [vmem:[%s2 + $0x1d0] sm:$0xf]
  %v191 = vld [vmem:[%s2 + $0x1d4] sm:$0xf]
  %v192 = vld [vmem:[%s2 + $0x1d8] sm:$0xf]
  %v193 = vld [vmem:[%s2 + $0x1dc] sm:$0xf]
  %v194 = vld [vmem:[%s2 + $0x1e0] sm:$0xf]
  %v195 = vld [vmem:[%s2 + $0x1e4] sm:$0xf]
  %v196 = vld [vmem:[%s2 + $0x1e8] sm:$0xf]
  %v197 = vld [vmem:[%s2 + $0x1ec] sm:$0xf]
  %v198 = vld [vmem:[%s2 + $0x1f0] sm:$0xf]
  %v199 = vld [vmem:[%s2 + $0x1f4] sm:$0xf]
  %v200 = vld [vmem:[%s2 + $0x1f8] sm:$0xf]
  %v201 = vld [vmem:[%s2 + $0x1fc] sm:$0xf]
  %v202 = vld [vmem:[%s3 + $0x90] sm:$0x1]
  %v203 = vlaneseq
  %v204 = vshrl.u32 %v203, 7
  %v205 = vsub.s32 0, %v204
  %v206 = vrot.slane %v202, %v205
  %v335 = vunpack.c.l.b16 %v74
  %v336 = vunpack.c.l.b16 %v75
  %v337 = vunpack.c.l.b16 %v76
  %v338 = vunpack.c.l.b16 %v77
  %v339 = vunpack.c.l.b16 %v78
  %v340 = vunpack.c.l.b16 %v79
  %v341 = vunpack.c.l.b16 %v80
  %v342 = vunpack.c.l.b16 %v81
  %v343 = vunpack.c.l.b16 %v82
  %v344 = vunpack.c.l.b16 %v83
  %v345 = vunpack.c.l.b16 %v84
  %v346 = vunpack.c.l.b16 %v85
  %v347 = vunpack.c.l.b16 %v86
  %v348 = vunpack.c.l.b16 %v87
  %v349 = vunpack.c.l.b16 %v88
  %v350 = vunpack.c.l.b16 %v89
  %v351 = vunpack.c.l.b16 %v90
  %v352 = vunpack.c.l.b16 %v91
  %v353 = vunpack.c.l.b16 %v92
  %v354 = vunpack.c.l.b16 %v93
  %v355 = vunpack.c.l.b16 %v94
  %v356 = vunpack.c.l.b16 %v95
  %v357 = vunpack.c.l.b16 %v96
  %v358 = vunpack.c.l.b16 %v97
  %v359 = vunpack.c.l.b16 %v98
  %v360 = vunpack.c.l.b16 %v99
  %v361 = vunpack.c.l.b16 %v100
  %v362 = vunpack.c.l.b16 %v101
  %v363 = vunpack.c.l.b16 %v102
  %v364 = vunpack.c.l.b16 %v103
  %v365 = vunpack.c.l.b16 %v104
  %v366 = vunpack.c.l.b16 %v105
  %v367 = vunpack.c.l.b16 %v106
  %v368 = vunpack.c.l.b16 %v107
  %v369 = vunpack.c.l.b16 %v108
  %v370 = vunpack.c.l.b16 %v109
  %v371 = vunpack.c.l.b16 %v110
  %v372 = vunpack.c.l.b16 %v111
  %v373 = vunpack.c.l.b16 %v112
  %v374 = vunpack.c.l.b16 %v113
  %v375 = vunpack.c.l.b16 %v114
  %v376 = vunpack.c.l.b16 %v115
  %v377 = vunpack.c.l.b16 %v116
  %v378 = vunpack.c.l.b16 %v117
  %v379 = vunpack.c.l.b16 %v118
  %v380 = vunpack.c.l.b16 %v119
  %v381 = vunpack.c.l.b16 %v120
  %v382 = vunpack.c.l.b16 %v121
  %v383 = vunpack.c.l.b16 %v122
  %v384 = vunpack.c.l.b16 %v123
  %v385 = vunpack.c.l.b16 %v124
  %v386 = vunpack.c.l.b16 %v125
  %v387 = vunpack.c.l.b16 %v126
  %v388 = vunpack.c.l.b16 %v127
  %v389 = vunpack.c.l.b16 %v128
  %v390 = vunpack.c.l.b16 %v129
  %v391 = vunpack.c.l.b16 %v130
  %v392 = vunpack.c.l.b16 %v131
  %v393 = vunpack.c.l.b16 %v132
  %v394 = vunpack.c.l.b16 %v133
  %v395 = vunpack.c.l.b16 %v134
  %v396 = vunpack.c.l.b16 %v135
  %v397 = vunpack.c.l.b16 %v136
  %v398 = vunpack.c.l.b16 %v137
  %v399 = vunpack.c.l.b16 %v138
  %v400 = vunpack.c.l.b16 %v139
  %v401 = vunpack.c.l.b16 %v140
  %v402 = vunpack.c.l.b16 %v141
  %v403 = vunpack.c.l.b16 %v142
  %v404 = vunpack.c.l.b16 %v143
  %v405 = vunpack.c.l.b16 %v144
  %v406 = vunpack.c.l.b16 %v145
  %v407 = vunpack.c.l.b16 %v146
  %v408 = vunpack.c.l.b16 %v147
  %v409 = vunpack.c.l.b16 %v148
  %v410 = vunpack.c.l.b16 %v149
  %v411 = vunpack.c.l.b16 %v150
  %v412 = vunpack.c.l.b16 %v151
  %v413 = vunpack.c.l.b16 %v152
  %v414 = vunpack.c.l.b16 %v153
  %v415 = vunpack.c.l.b16 %v154
  %v416 = vunpack.c.l.b16 %v155
  %v417 = vunpack.c.l.b16 %v156
  %v418 = vunpack.c.l.b16 %v157
  %v419 = vunpack.c.l.b16 %v158
  %v420 = vunpack.c.l.b16 %v159
  %v421 = vunpack.c.l.b16 %v160
  %v422 = vunpack.c.l.b16 %v161
  %v423 = vunpack.c.l.b16 %v162
  %v424 = vunpack.c.l.b16 %v163
  %v425 = vunpack.c.l.b16 %v164
  %v426 = vunpack.c.l.b16 %v165
  %v427 = vunpack.c.l.b16 %v166
  %v428 = vunpack.c.l.b16 %v167
  %v429 = vunpack.c.l.b16 %v168
  %v430 = vunpack.c.l.b16 %v169
  %v431 = vunpack.c.l.b16 %v170
  %v432 = vunpack.c.l.b16 %v171
  %v433 = vunpack.c.l.b16 %v172
  %v434 = vunpack.c.l.b16 %v173
  %v435 = vunpack.c.l.b16 %v174
  %v436 = vunpack.c.l.b16 %v175
  %v437 = vunpack.c.l.b16 %v176
  %v438 = vunpack.c.l.b16 %v177
  %v439 = vunpack.c.l.b16 %v178
  %v440 = vunpack.c.l.b16 %v179
  %v441 = vunpack.c.l.b16 %v180
  %v442 = vunpack.c.l.b16 %v181
  %v443 = vunpack.c.l.b16 %v182
  %v444 = vunpack.c.l.b16 %v183
  %v445 = vunpack.c.l.b16 %v184
  %v446 = vunpack.c.l.b16 %v185
  %v447 = vunpack.c.l.b16 %v186
  %v448 = vunpack.c.l.b16 %v187
  %v449 = vunpack.c.l.b16 %v188
  %v450 = vunpack.c.l.b16 %v189
  %v451 = vunpack.c.l.b16 %v190
  %v452 = vunpack.c.l.b16 %v191
  %v453 = vunpack.c.l.b16 %v192
  %v454 = vunpack.c.l.b16 %v193
  %v455 = vunpack.c.l.b16 %v194
  %v456 = vunpack.c.l.b16 %v195
  %v457 = vunpack.c.l.b16 %v196
  %v458 = vunpack.c.l.b16 %v197
  %v459 = vunpack.c.l.b16 %v198
  %v460 = vunpack.c.l.b16 %v199
  %v461 = vunpack.c.l.b16 %v200
  %v462 = vunpack.c.l.b16 %v201
  %v463 = vpack.c.b16 %v336, %v335
  %v464 = vpack.c.b16 %v338, %v337
  %v465 = vpack.c.b16 %v340, %v339
  %v466 = vpack.c.b16 %v342, %v341
  %v467 = vpack.c.b16 %v344, %v343
  %v468 = vpack.c.b16 %v346, %v345
  %v469 = vpack.c.b16 %v348, %v347
  %v470 = vpack.c.b16 %v350, %v349
  %v471 = vpack.c.b16 %v352, %v351
  %v472 = vpack.c.b16 %v354, %v353
  %v473 = vpack.c.b16 %v356, %v355
  %v474 = vpack.c.b16 %v358, %v357
  %v475 = vpack.c.b16 %v360, %v359
  %v476 = vpack.c.b16 %v362, %v361
  %v477 = vpack.c.b16 %v364, %v363
  %v478 = vpack.c.b16 %v366, %v365
  %v479 = vpack.c.b16 %v368, %v367
  %v480 = vpack.c.b16 %v370, %v369
  %v481 = vpack.c.b16 %v372, %v371
  %v482 = vpack.c.b16 %v374, %v373
  %v483 = vpack.c.b16 %v376, %v375
  %v484 = vpack.c.b16 %v378, %v377
  %v485 = vpack.c.b16 %v380, %v379
  %v486 = vpack.c.b16 %v382, %v381
  %v487 = vpack.c.b16 %v384, %v383
  %v488 = vpack.c.b16 %v386, %v385
  %v489 = vpack.c.b16 %v388, %v387
  %v490 = vpack.c.b16 %v390, %v389
  %v491 = vpack.c.b16 %v392, %v391
  %v492 = vpack.c.b16 %v394, %v393
  %v493 = vpack.c.b16 %v396, %v395
  %v494 = vpack.c.b16 %v398, %v397
  %v495 = vpack.c.b16 %v400, %v399
  %v496 = vpack.c.b16 %v402, %v401
  %v497 = vpack.c.b16 %v404, %v403
  %v498 = vpack.c.b16 %v406, %v405
  %v499 = vpack.c.b16 %v408, %v407
  %v500 = vpack.c.b16 %v410, %v409
  %v501 = vpack.c.b16 %v412, %v411
  %v502 = vpack.c.b16 %v414, %v413
  %v503 = vpack.c.b16 %v416, %v415
  %v504 = vpack.c.b16 %v418, %v417
  %v505 = vpack.c.b16 %v420, %v419
  %v506 = vpack.c.b16 %v422, %v421
  %v507 = vpack.c.b16 %v424, %v423
  %v508 = vpack.c.b16 %v426, %v425
  %v509 = vpack.c.b16 %v428, %v427
  %v510 = vpack.c.b16 %v430, %v429
  %v511 = vpack.c.b16 %v432, %v431
  %v512 = vpack.c.b16 %v434, %v433
  %v513 = vpack.c.b16 %v436, %v435
  %v514 = vpack.c.b16 %v438, %v437
  %v515 = vpack.c.b16 %v440, %v439
  %v516 = vpack.c.b16 %v442, %v441
  %v517 = vpack.c.b16 %v444, %v443
  %v518 = vpack.c.b16 %v446, %v445
  %v519 = vpack.c.b16 %v448, %v447
  %v520 = vpack.c.b16 %v450, %v449
  %v521 = vpack.c.b16 %v452, %v451
  %v522 = vpack.c.b16 %v454, %v453
  %v523 = vpack.c.b16 %v456, %v455
  %v524 = vpack.c.b16 %v458, %v457
  %v525 = vpack.c.b16 %v460, %v459
  %v526 = vpack.c.b16 %v462, %v461
  %591 = vmatprep.subr.bf16.mxu0 0
  %592 = vmatpush1.bf16.msra.mxu0 %v463
  %593 = vmatprep.subr.bf16.mxu0 0
  %594 = vmatpush1.bf16.msra.mxu0 %v464
  %595 = vmatprep.subr.bf16.mxu0 0
  %596 = vmatpush1.bf16.msra.mxu0 %v465
  %597 = vmatprep.subr.bf16.mxu0 0
  %598 = vmatpush1.bf16.msra.mxu0 %v466
  %599 = vmatprep.subr.bf16.mxu0 0
  %600 = vmatpush1.bf16.msra.mxu0 %v467
  %601 = vmatprep.subr.bf16.mxu0 0
  %602 = vmatpush1.bf16.msra.mxu0 %v468
  %603 = vmatprep.subr.bf16.mxu0 0
  %604 = vmatpush1.bf16.msra.mxu0 %v469
  %605 = vmatprep.subr.bf16.mxu0 0
  %606 = vmatpush1.bf16.msra.mxu0 %v470
  %607 = vmatprep.subr.bf16.mxu0 0
  %608 = vmatpush1.bf16.msra.mxu0 %v471
  %609 = vmatprep.subr.bf16.mxu0 0
  %610 = vmatpush1.bf16.msra.mxu0 %v472
  %611 = vmatprep.subr.bf16.mxu0 0
  %612 = vmatpush1.bf16.msra.mxu0 %v473
  %613 = vmatprep.subr.bf16.mxu0 0
  %614 = vmatpush1.bf16.msra.mxu0 %v474
  %615 = vmatprep.subr.bf16.mxu0 0
  %616 = vmatpush1.bf16.msra.mxu0 %v475
  %617 = vmatprep.subr.bf16.mxu0 0
  %618 = vmatpush1.bf16.msra.mxu0 %v476
  %619 = vmatprep.subr.bf16.mxu0 0
  %620 = vmatpush1.bf16.msra.mxu0 %v477
  %621 = vmatprep.subr.bf16.mxu0 0
  %622 = vmatpush1.bf16.msra.mxu0 %v478
  %623 = vmatprep.mubr.bf16.mxu0 %v67
  %624 = vmatmul.mubr.bf16.gmra.mrb[0].mxu0 %v66
  %v625 = vpop.f32.mrb[0].mxu0
  %v626 = vadd.f32 %v206, %v625
  %v627 = vpop.f32.mrb[0].mxu0
  %v628 = vpop.f32.mrb[0].mxu0
  %v629 = vpop.f32.mrb[0].mxu0
  %630 = vdwg.mxu0
  %631 = vmatprep.subr.bf16.mxu0 0
  %632 = vmatpush1.bf16.msra.mxu0 %v479
  %633 = vmatprep.subr.bf16.mxu0 0
  %634 = vmatpush1.bf16.msra.mxu0 %v480
  %635 = vmatprep.subr.bf16.mxu0 0
  %636 = vmatpush1.bf16.msra.mxu0 %v481
  %637 = vmatprep.subr.bf16.mxu0 0
  %638 = vmatpush1.bf16.msra.mxu0 %v482
  %639 = vmatprep.subr.bf16.mxu0 0
  %640 = vmatpush1.bf16.msra.mxu0 %v483
  %641 = vmatprep.subr.bf16.mxu0 0
  %642 = vmatpush1.bf16.msra.mxu0 %v484
  %643 = vmatprep.subr.bf16.mxu0 0
  %644 = vmatpush1.bf16.msra.mxu0 %v485
  %645 = vmatprep.subr.bf16.mxu0 0
  %646 = vmatpush1.bf16.msra.mxu0 %v486
  %647 = vmatprep.subr.bf16.mxu0 0
  %648 = vmatpush1.bf16.msra.mxu0 %v487
  %649 = vmatprep.subr.bf16.mxu0 0
  %650 = vmatpush1.bf16.msra.mxu0 %v488
  %651 = vmatprep.subr.bf16.mxu0 0
  %652 = vmatpush1.bf16.msra.mxu0 %v489
  %653 = vmatprep.subr.bf16.mxu0 0
  %654 = vmatpush1.bf16.msra.mxu0 %v490
  %655 = vmatprep.subr.bf16.mxu0 0
  %656 = vmatpush1.bf16.msra.mxu0 %v491
  %657 = vmatprep.subr.bf16.mxu0 0
  %658 = vmatpush1.bf16.msra.mxu0 %v492
  %659 = vmatprep.subr.bf16.mxu0 0
  %660 = vmatpush1.bf16.msra.mxu0 %v493
  %661 = vmatprep.subr.bf16.mxu0 0
  %662 = vmatpush1.bf16.msra.mxu0 %v494
  %663 = vmatprep.mubr.bf16.mxu0 %v69
  %664 = vmatmul.mubr.bf16.gmra.mrb[0].mxu0 %v68
  %v665 = vpop.f32.mrb[0].mxu0
  %v666 = vadd.f32 %v626, %v665
  %v667 = vpop.f32.mrb[0].mxu0
  %v668 = vpop.f32.mrb[0].mxu0
  %v669 = vpop.f32.mrb[0].mxu0
  %670 = vdwg.mxu0
  %671 = vmatprep.subr.bf16.mxu0 0
  %672 = vmatpush1.bf16.msra.mxu0 %v495
  %673 = vmatprep.subr.bf16.mxu0 0
  %674 = vmatpush1.bf16.msra.mxu0 %v496
  %675 = vmatprep.subr.bf16.mxu0 0
  %676 = vmatpush1.bf16.msra.mxu0 %v497
  %677 = vmatprep.subr.bf16.mxu0 0
  %678 = vmatpush1.bf16.msra.mxu0 %v498
  %679 = vmatprep.subr.bf16.mxu0 0
  %680 = vmatpush1.bf16.msra.mxu0 %v499
  %681 = vmatprep.subr.bf16.mxu0 0
  %682 = vmatpush1.bf16.msra.mxu0 %v500
  %683 = vmatprep.subr.bf16.mxu0 0
  %684 = vmatpush1.bf16.msra.mxu0 %v501
  %685 = vmatprep.subr.bf16.mxu0 0
  %686 = vmatpush1.bf16.msra.mxu0 %v502
  %687 = vmatprep.subr.bf16.mxu0 0
  %688 = vmatpush1.bf16.msra.mxu0 %v503
  %689 = vmatprep.subr.bf16.mxu0 0
  %690 = vmatpush1.bf16.msra.mxu0 %v504
  %691 = vmatprep.subr.bf16.mxu0 0
  %692 = vmatpush1.bf16.msra.mxu0 %v505
  %693 = vmatprep.subr.bf16.mxu0 0
  %694 = vmatpush1.bf16.msra.mxu0 %v506
  %695 = vmatprep.subr.bf16.mxu0 0
  %696 = vmatpush1.bf16.msra.mxu0 %v507
  %697 = vmatprep.subr.bf16.mxu0 0
  %698 = vmatpush1.bf16.msra.mxu0 %v508
  %699 = vmatprep.subr.bf16.mxu0 0
  %700 = vmatpush1.bf16.msra.mxu0 %v509
  %701 = vmatprep.subr.bf16.mxu0 0
  %702 = vmatpush1.bf16.msra.mxu0 %v510
  %703 = vmatprep.mubr.bf16.mxu0 %v71
  %704 = vmatmul.mubr.bf16.gmra.mrb[0].mxu0 %v70
  %v705 = vpop.f32.mrb[0].mxu0
  %v706 = vadd.f32 %v666, %v705
  %v707 = vpop.f32.mrb[0].mxu0
  %v708 = vpop.f32.mrb[0].mxu0
  %v709 = vpop.f32.mrb[0].mxu0
  %710 = vdwg.mxu0
  %711 = vmatprep.subr.bf16.mxu0 0
  %712 = vmatpush1.bf16.msra.mxu0 %v511
  %713 = vmatprep.subr.bf16.mxu0 0
  %714 = vmatpush1.bf16.msra.mxu0 %v512
  %715 = vmatprep.subr.bf16.mxu0 0
  %716 = vmatpush1.bf16.msra.mxu0 %v513
  %717 = vmatprep.subr.bf16.mxu0 0
  %718 = vmatpush1.bf16.msra.mxu0 %v514
  %719 = vmatprep.subr.bf16.mxu0 0
  %720 = vmatpush1.bf16.msra.mxu0 %v515
  %721 = vmatprep.subr.bf16.mxu0 0
  %722 = vmatpush1.bf16.msra.mxu0 %v516
  %723 = vmatprep.subr.bf16.mxu0 0
  %724 = vmatpush1.bf16.msra.mxu0 %v517
  %725 = vmatprep.subr.bf16.mxu0 0
  %726 = vmatpush1.bf16.msra.mxu0 %v518
  %727 = vmatprep.subr.bf16.mxu0 0
  %728 = vmatpush1.bf16.msra.mxu0 %v519
  %729 = vmatprep.subr.bf16.mxu0 0
  %730 = vmatpush1.bf16.msra.mxu0 %v520
  %731 = vmatprep.subr.bf16.mxu0 0
  %732 = vmatpush1.bf16.msra.mxu0 %v521
  %733 = vmatprep.subr.bf16.mxu0 0
  %734 = vmatpush1.bf16.msra.mxu0 %v522
  %735 = vmatprep.subr.bf16.mxu0 0
  %736 = vmatpush1.bf16.msra.mxu0 %v523
  %737 = vmatprep.subr.bf16.mxu0 0
  %738 = vmatpush1.bf16.msra.mxu0 %v524
  %739 = vmatprep.subr.bf16.mxu0 0
  %740 = vmatpush1.bf16.msra.mxu0 %v525
  %741 = vmatprep.subr.bf16.mxu0 0
  %742 = vmatpush1.bf16.msra.mxu0 %v526
  %743 = vmatprep.mubr.bf16.mxu0 %v73
  %744 = vmatmul.mubr.bf16.gmra.mrb[0].mxu0 %v72
  %v745 = vpop.f32.mrb[0].mxu0
  %v746 = vadd.f32 %v706, %v745
  %v747 = vpop.f32.mrb[0].mxu0
  %v748 = vpop.f32.mrb[0].mxu0
  %v749 = vpop.f32.mrb[0].mxu0
  %750 = vdwg.mxu0
  %v751 = vmax.f32 %v746, 0.0
  %v752 = vld [vmem:[%s3] sm:$0xff]
  %v753 = vld [vmem:[%s3 + $0x8] sm:$0xff]
  %v754 = vld [vmem:[%s3 + $0x10] sm:$0xff]
  %v755 = vld [vmem:[%s3 + $0x18] sm:$0xff]
  %v756 = vld [vmem:[%s3 + $0x20] sm:$0xff]
  %v757 = vld [vmem:[%s3 + $0x28] sm:$0xff]
  %v758 = vld [vmem:[%s3 + $0x30] sm:$0xff]
  %v759 = vld [vmem:[%s3 + $0x38] sm:$0xff]
  %v760 = vld [vmem:[%s1] sm:$0x3]
  %v761 = vld [vmem:[%s3 + $0x40] sm:$0xff]
  %v762 = vld [vmem:[%s3 + $0x48] sm:$0xff]
  %vm763 = vcmask 130048
  %v765 = vsel %vm763, %v760, 0
  %767 = vmatprep.subr.mxu0 0.0
  %768 = vmatpush1.msra.mxu0 %v761
  %769 = vmatprep.subr.mxu0 0.0
  %770 = vmatpush1.msra.mxu0 %v762
  %771 = vmatprep.subr.mxu0 0.0
  %772 = vmatpush1.msra.mxu0 0.0
  %773 = vmatprep.subr.mxu0 0.0
  %774 = vmatpush1.msra.mxu0 0.0
  %775 = vmatprep.subr.mxu0 0.0
  %776 = vmatpush1.msra.mxu0 0.0
  %777 = vmatprep.subr.mxu0 0.0
  %778 = vmatpush1.msra.mxu0 0.0
  %779 = vmatprep.subr.mxu0 0.0
  %780 = vmatpush1.msra.mxu0 0.0
  %781 = vmatprep.subr.mxu0 0.0
  %782 = vmatpush1.msra.mxu0 0.0
  %783 = vmatprep.subr.mxu0 0.0
  %784 = vmatpush1.msra.mxu0 0.0
  %785 = vmatprep.subr.mxu0 0.0
  %786 = vmatpush1.msra.mxu0 0.0
  %787 = vmatprep.subr.mxu0 0.0
  %788 = vmatpush1.msra.mxu0 0.0
  %789 = vmatprep.subr.mxu0 0.0
  %790 = vmatpush1.msra.mxu0 0.0
  %791 = vmatprep.subr.mxu0 0.0
  %792 = vmatpush1.msra.mxu0 0.0
  %793 = vmatprep.subr.mxu0 0.0
  %794 = vmatpush1.msra.mxu0 0.0
  %795 = vmatprep.subr.mxu0 0.0
  %796 = vmatpush1.msra.mxu0 0.0
  %797 = vmatprep.subr.mxu0 0.0
  %798 = vmatpush1.msra.mxu0 0.0
  %799 = vmatprep.subr.mxu0 0.0
  %800 = vmatpush1.msra.mxu0 0.0
  %801 = vmatprep.subr.mxu0 0.0
  %802 = vmatpush1.msra.mxu0 0.0
  %803 = vmatprep.subr.mxu0 0.0
  %804 = vmatpush1.msra.mxu0 0.0
  %805 = vmatprep.subr.mxu0 0.0
  %806 = vmatpush1.msra.mxu0 0.0
  %807 = vmatprep.subr.mxu0 0.0
  %808 = vmatpush1.msra.mxu0 0.0
  %809 = vmatprep.subr.mxu0 0.0
  %810 = vmatpush1.msra.mxu0 0.0
  %811 = vmatprep.subr.mxu0 0.0
  %812 = vmatpush1.msra.mxu0 0.0
  %813 = vmatprep.subr.mxu0 0.0
  %814 = vmatpush1.msra.mxu0 0.0
  %815 = vmatprep.subr.mxu0 0.0
  %816 = vmatpush1.msra.mxu0 0.0
  %817 = vmatprep.subr.mxu0 0.0
  %818 = vmatpush1.msra.mxu0 0.0
  %819 = vmatprep.subr.mxu0 0.0
  %820 = vmatpush1.msra.mxu0 0.0
  %821 = vmatprep.subr.mxu0 0.0
  %822 = vmatpush1.msra.mxu0 0.0
  %823 = vmatprep.subr.mxu0 0.0
  %824 = vmatpush1.msra.mxu0 0.0
  %825 = vmatprep.subr.mxu0 0.0
  %826 = vmatpush1.msra.mxu0 0.0
  %827 = vmatprep.subr.mxu0 0.0
  %828 = vmatpush1.msra.mxu0 0.0
  %829 = vmatprep.subr.mxu0 0.0
  %830 = vmatpush1.msra.mxu0 0.0
  %831 = vmatprep.mubr.f32.mxu0 0.0
  %832 = vmatmul.mubr.f32.gmra.mrb[0].mxu0 %v765
  %v833 = vpop.f32.mrb[0].mxu0
  %v834 = vadd.f32 0.0, %v833
  %v835 = vpop.f32.mrb[0].mxu0
  %836 = vdwg.mxu0
  %vm837 = vcmask 523264
  %v839 = vsel %vm837, %v751, 0
  %841 = vmatprep.subr.mxu0 0.0
  %842 = vmatpush1.msra.mxu0 %v752
  %843 = vmatprep.subr.mxu0 0.0
  %844 = vmatpush1.msra.mxu0 %v753
  %845 = vmatprep.subr.mxu0 0.0
  %846 = vmatpush1.msra.mxu0 %v754
  %847 = vmatprep.subr.mxu0 0.0
  %848 = vmatpush1.msra.mxu0 %v755
  %849 = vmatprep.subr.mxu0 0.0
  %850 = vmatpush1.msra.mxu0 %v756
  %851 = vmatprep.subr.mxu0 0.0
  %852 = vmatpush1.msra.mxu0 %v757
  %853 = vmatprep.subr.mxu0 0.0
  %854 = vmatpush1.msra.mxu0 %v758
  %855 = vmatprep.subr.mxu0 0.0
  %856 = vmatpush1.msra.mxu0 %v759
  %857 = vmatprep.subr.mxu0 0.0
  %858 = vmatpush1.msra.mxu0 0.0
  %859 = vmatprep.subr.mxu0 0.0
  %860 = vmatpush1.msra.mxu0 0.0
  %861 = vmatprep.subr.mxu0 0.0
  %862 = vmatpush1.msra.mxu0 0.0
  %863 = vmatprep.subr.mxu0 0.0
  %864 = vmatpush1.msra.mxu0 0.0
  %865 = vmatprep.subr.mxu0 0.0
  %866 = vmatpush1.msra.mxu0 0.0
  %867 = vmatprep.subr.mxu0 0.0
  %868 = vmatpush1.msra.mxu0 0.0
  %869 = vmatprep.subr.mxu0 0.0
  %870 = vmatpush1.msra.mxu0 0.0
  %871 = vmatprep.subr.mxu0 0.0
  %872 = vmatpush1.msra.mxu0 0.0
  %873 = vmatprep.subr.mxu0 0.0
  %874 = vmatpush1.msra.mxu0 0.0
  %875 = vmatprep.subr.mxu0 0.0
  %876 = vmatpush1.msra.mxu0 0.0
  %877 = vmatprep.subr.mxu0 0.0
  %878 = vmatpush1.msra.mxu0 0.0
  %879 = vmatprep.subr.mxu0 0.0
  %880 = vmatpush1.msra.mxu0 0.0
  %881 = vmatprep.subr.mxu0 0.0
  %882 = vmatpush1.msra.mxu0 0.0
  %883 = vmatprep.subr.mxu0 0.0
  %884 = vmatpush1.msra.mxu0 0.0
  %885 = vmatprep.subr.mxu0 0.0
  %886 = vmatpush1.msra.mxu0 0.0
  %887 = vmatprep.subr.mxu0 0.0
  %888 = vmatpush1.msra.mxu0 0.0
  %889 = vmatprep.subr.mxu0 0.0
  %890 = vmatpush1.msra.mxu0 0.0
  %891 = vmatprep.subr.mxu0 0.0
  %892 = vmatpush1.msra.mxu0 0.0
  %893 = vmatprep.subr.mxu0 0.0
  %894 = vmatpush1.msra.mxu0 0.0
  %895 = vmatprep.subr.mxu0 0.0
  %896 = vmatpush1.msra.mxu0 0.0
  %897 = vmatprep.subr.mxu0 0.0
  %898 = vmatpush1.msra.mxu0 0.0
  %899 = vmatprep.subr.mxu0 0.0
  %900 = vmatpush1.msra.mxu0 0.0
  %901 = vmatprep.subr.mxu0 0.0
  %902 = vmatpush1.msra.mxu0 0.0
  %903 = vmatprep.subr.mxu0 0.0
  %904 = vmatpush1.msra.mxu0 0.0
  %905 = vmatprep.mubr.f32.mxu0 0.0
  %906 = vmatmul.mubr.f32.gmra.mrb[0].mxu0 %v839
  %v907 = vpop.f32.mrb[0].mxu0
  %v908 = vadd.f32 %v834, %v907
  %v909 = vpop.f32.mrb[0].mxu0
  %910 = vdwg.mxu0
  %v911 = vld [vmem:[%s3 + $0x91] sm:$0x1]
  %v912 = vlaneseq
  %v913 = vshrl.u32 %v912, 7
  %v914 = vsub.s32 0, %v913
  %v915 = vrot.slane %v911, %v914
  %v916 = vadd.f32 %v908, %v915
  %v917 = vmax.f32 %v916, 0.0
  %v918 = vld [vmem:[%s3 + $0x50] sm:$0xff]
  %v919 = vld [vmem:[%s3 + $0x58] sm:$0xff]
  %v920 = vld [vmem:[%s3 + $0x60] sm:$0xff]
  %v921 = vld [vmem:[%s3 + $0x68] sm:$0xff]
  %v922 = vld [vmem:[%s3 + $0x70] sm:$0xff]
  %v923 = vld [vmem:[%s3 + $0x78] sm:$0xff]
  %v924 = vld [vmem:[%s3 + $0x80] sm:$0xff]
  %v925 = vld [vmem:[%s3 + $0x88] sm:$0xff]
  %v926 = vld [vmem:[%s3 + $0x92] sm:$0x1]
  %v927 = vlaneseq
  %v928 = vshrl.u32 %v927, 7
  %v929 = vsub.s32 0, %v928
  %v930 = vrot.slane %v926, %v929
  %v932 = vsel %vm837, %v917, 0
  %934 = vmatprep.subr.mxu0 0.0
  %935 = vmatpush1.msra.mxu0 %v918
  %936 = vmatprep.subr.mxu0 0.0
  %937 = vmatpush1.msra.mxu0 %v919
  %938 = vmatprep.subr.mxu0 0.0
  %939 = vmatpush1.msra.mxu0 %v920
  %940 = vmatprep.subr.mxu0 0.0
  %941 = vmatpush1.msra.mxu0 %v921
  %942 = vmatprep.subr.mxu0 0.0
  %943 = vmatpush1.msra.mxu0 %v922
  %944 = vmatprep.subr.mxu0 0.0
  %945 = vmatpush1.msra.mxu0 %v923
  %946 = vmatprep.subr.mxu0 0.0
  %947 = vmatpush1.msra.mxu0 %v924
  %948 = vmatprep.subr.mxu0 0.0
  %949 = vmatpush1.msra.mxu0 %v925
  %950 = vmatprep.subr.mxu0 0.0
  %951 = vmatpush1.msra.mxu0 0.0
  %952 = vmatprep.subr.mxu0 0.0
  %953 = vmatpush1.msra.mxu0 0.0
  %954 = vmatprep.subr.mxu0 0.0
  %955 = vmatpush1.msra.mxu0 0.0
  %956 = vmatprep.subr.mxu0 0.0
  %957 = vmatpush1.msra.mxu0 0.0
  %958 = vmatprep.subr.mxu0 0.0
  %959 = vmatpush1.msra.mxu0 0.0
  %960 = vmatprep.subr.mxu0 0.0
  %961 = vmatpush1.msra.mxu0 0.0
  %962 = vmatprep.subr.mxu0 0.0
  %963 = vmatpush1.msra.mxu0 0.0
  %964 = vmatprep.subr.mxu0 0.0
  %965 = vmatpush1.msra.mxu0 0.0
  %966 = vmatprep.subr.mxu0 0.0
  %967 = vmatpush1.msra.mxu0 0.0
  %968 = vmatprep.subr.mxu0 0.0
  %969 = vmatpush1.msra.mxu0 0.0
  %970 = vmatprep.subr.mxu0 0.0
  %971 = vmatpush1.msra.mxu0 0.0
  %972 = vmatprep.subr.mxu0 0.0
  %973 = vmatpush1.msra.mxu0 0.0
  %974 = vmatprep.subr.mxu0 0.0
  %975 = vmatpush1.msra.mxu0 0.0
  %976 = vmatprep.subr.mxu0 0.0
  %977 = vmatpush1.msra.mxu0 0.0
  %978 = vmatprep.subr.mxu0 0.0
  %979 = vmatpush1.msra.mxu0 0.0
  %980 = vmatprep.subr.mxu0 0.0
  %981 = vmatpush1.msra.mxu0 0.0
  %982 = vmatprep.subr.mxu0 0.0
  %983 = vmatpush1.msra.mxu0 0.0
  %984 = vmatprep.subr.mxu0 0.0
  %985 = vmatpush1.msra.mxu0 0.0
  %986 = vmatprep.subr.mxu0 0.0
  %987 = vmatpush1.msra.mxu0 0.0
  %988 = vmatprep.subr.mxu0 0.0
  %989 = vmatpush1.msra.mxu0 0.0
  %990 = vmatprep.subr.mxu0 0.0
  %991 = vmatpush1.msra.mxu0 0.0
  %992 = vmatprep.subr.mxu0 0.0
  %993 = vmatpush1.msra.mxu0 0.0
  %994 = vmatprep.subr.mxu0 0.0
  %995 = vmatpush1.msra.mxu0 0.0
  %996 = vmatprep.subr.mxu0 0.0
  %997 = vmatpush1.msra.mxu0 0.0
  %998 = vmatprep.mubr.f32.mxu0 0.0
  %999 = vmatmul.mubr.f32.gmra.mrb[0].mxu0 %v932
  %v1000 = vpop.f32.mrb[0].mxu0
  %v1001 = vadd.f32 %v930, %v1000
  %v1002 = vpop.f32.mrb[0].mxu0
  %1003 = vdwg.mxu0
  %vm1004 = vcmask 1024
  %1005 = vst.msk [vmem:[%s4] sm:$0x3] %vm1004, %v1001
  %1007 = vrot.lane.b32.xlu0 %v1001, 127
  %v1008 = vpop.permute.xlu0 %1007
  %1010 = vst.msk [vmem:[%s5] sm:$0x3] %vm1004, %v1008
  // Predicated region
  $region18: #{qfunction_forward.1} parent=0 // pred_check
    _
  $region19: #{qfunction_forward.1} parent=0 // pred_check_branch
    %1012 = sbr.rel (0) target = $region21
  $region20: #{qfunction_forward.1} parent=0 // pred_region
    _
  $region21: #{qfunction_forward.1} parent=0 // pred_fallthru
    _
  // Predicated region
  $region22: #{qfunction_forward.1} parent=0 // pred_check
    _
  $region23: #{qfunction_forward.1} parent=0 // pred_check_branch
    %1014 = sbr.rel (0) target = $region25
  $region24: #{qfunction_forward.1} parent=0 // pred_region
    _
  $region25: #{qfunction_forward.1} parent=0 // pred_fallthru
    _
  // Predicated region
  $region26: #{qfunction_forward.1} parent=0 // pred_check
    _
  $region27: #{qfunction_forward.1} parent=0 // pred_check_branch
    %1016 = sbr.rel (0) target = $region29
  $region28: #{qfunction_forward.1} parent=0 // pred_region
    _
  $region29: #{qfunction_forward.1} parent=0 // pred_fallthru
    _
  // Predicated region
  $region30: #{qfunction_forward.1} parent=0 // pred_check
    _
  $region31: #{qfunction_forward.1} parent=0 // pred_check_branch
    %1018 = sbr.rel (0) target = $region33
  $region32: #{qfunction_forward.1} parent=0 // pred_region
    _
  $region33: #{qfunction_forward.1} parent=0 // pred_fallthru
    _

</llo_original>
